<compile_context>
chip_gen: v7x
topology: tpu7x:2x2x1
jax: 0.10.0
libtpu: 0.0.40
codegen_flags: <defaults>
</compile_context>

<pallas_src>
import math
import functools

import jax
import jax.numpy as jnp
from jax.experimental import pallas as pl
from jax.experimental.pallas import tpu as pltpu


def _mha_kernel(x_ref, mask_ref, wqkv_ref, bqkv_ref, wo_ref, bo_ref,
                gamma_ref, beta_ref, o_ref, qkv_ref,
                *, tq, n_heads, head_dim, hidden, eps):
    qi = pl.program_id(1)
    bf16 = jnp.bfloat16
    H = hidden
    D = head_dim

    # Once per batch (q-tile 0): full-sequence fused QKV projection into the
    # persistent bf16 scratch.  1/sqrt(D) is pre-folded into Wq / bq.
    @pl.when(qi == 0)
    def _():
        x_bf = x_ref[...].astype(bf16)                                    # (S, H)
        qkv = jnp.dot(x_bf, wqkv_ref[...],
                      preferred_element_type=jnp.float32) + bqkv_ref[...]  # (S, 3H) f32
        qkv_ref[...] = qkv.astype(bf16)

    q_start = qi * tq
    if tq % 128 == 0:
        q_start = pl.multiple_of(q_start, 128)
    elif tq % 8 == 0:
        q_start = pl.multiple_of(q_start, 8)

    q_rows = qkv_ref[pl.ds(q_start, tq), :]        # (tq, 3H) bf16 (Q already scaled)
    k_all = qkv_ref[:, H:2 * H]                    # (S, H)  bf16
    v_all = qkv_ref[:, 2 * H:3 * H]                # (S, H)  bf16
    mask = mask_ref[...]                           # (1, S)  f32 additive mask

    # Per-head attention; n_heads is a compile-time constant (static unroll,
    # static lane slices — no dynamic lane indexing).
    ctx_parts = []
    for h in range(n_heads):
        lo, hi = h * D, (h + 1) * D
        qh = q_rows[:, lo:hi]                      # (tq, D) bf16
        kh = k_all[:, lo:hi]                       # (S, D)  bf16
        vh = v_all[:, lo:hi]                       # (S, D)  bf16

        # scores = q @ k^T via dot_general contracting on head_dim (no .T).
        s = jax.lax.dot_general(qh, kh, (((1,), (1,)), ((), ())),
                                preferred_element_type=jnp.float32)        # (tq, S)
        s = s + mask
        s = s - jnp.max(s, axis=-1, keepdims=True)
        p = jnp.exp(s)                                                     # (tq, S) f32
        l = jnp.sum(p, axis=-1, keepdims=True)                             # (tq, 1)
        # TODO(synk): attn_dropout omitted (eval-mode identity)
        ctx = jnp.dot(p.astype(bf16), vh,
                      preferred_element_type=jnp.float32)                  # (tq, D) f32
        # Normalize AFTER the PV matmul: (tq, D) multiply instead of (tq, S),
        # denominator reciprocal on the EUP.
        ctx = ctx * pl.reciprocal(l, approx=True)
        ctx_parts.append(ctx)

    # Lane-dense (tq, H) context; single K=H output projection on the MXU.
    ctx_all = jnp.concatenate(ctx_parts, axis=-1).astype(bf16)             # (tq, H)
    proj = jnp.dot(ctx_all, wo_ref[...],
                   preferred_element_type=jnp.float32)                     # (tq, H) f32

    x_res = x_ref[pl.ds(q_start, tq), :]                                   # (tq, H) f32
    hidden_states = proj + bo_ref[...] + x_res
    # TODO(synk): out_dropout omitted (eval-mode identity)
    mean = jnp.mean(hidden_states, axis=-1, keepdims=True)
    var = jnp.mean((hidden_states - mean) ** 2, axis=-1, keepdims=True)
    normed = (hidden_states - mean) * jax.lax.rsqrt(var + eps)
    o_ref[...] = (normed * gamma_ref[...] + beta_ref[...]).astype(o_ref.dtype)


def multi_head_attention(x, attention_mask, params, *, n_heads, layer_norm_eps,
                         q_block=256):
    """x: (B, S, H) float32; attention_mask: (B, 1, 1, S) additive float32."""
    B, S, H = x.shape
    assert H % n_heads == 0
    D = H // n_heads

    # q-tile size: largest divisor of S that is <= q_block (prefer multiples of 8).
    tq = min(q_block, S)
    if S % tq != 0:
        cands = [d for d in range(1, min(q_block, S) + 1) if S % d == 0]
        mult8 = [d for d in cands if d % 8 == 0]
        tq = max(mult8) if mult8 else max(cands)
    n_q = S // tq

    bf = jnp.bfloat16
    scale = 1.0 / math.sqrt(D)
    # Fuse QKV weights/biases (one N=3H matmul); fold 1/sqrt(D) into Wq / bq.
    wqkv = jnp.concatenate(
        [params["wq"] * scale, params["wk"], params["wv"]], axis=1).astype(bf)   # (H, 3H)
    bqkv = jnp.concatenate(
        [params["bq"] * scale, params["bk"], params["bv"]]).reshape(1, 3 * H
                                                                    ).astype(jnp.float32)
    wo = params["wo"].astype(bf)                                                  # (H, H)
    bo = params["bo"].reshape(1, H)
    gamma = params["gamma"].reshape(1, H)
    beta = params["beta"].reshape(1, H)
    mask = attention_mask.reshape(B, 1, S)

    kern = functools.partial(_mha_kernel, tq=tq, n_heads=n_heads, head_dim=D,
                             hidden=H, eps=layer_norm_eps)

    const2 = lambda shape: pl.BlockSpec(shape, lambda b, q: (0, 0))

    # Rough VMEM budget with headroom, clamped to v7x's 64 MiB physical VMEM.
    est = (2 * S * H * 4            # x block (f32, double-buffered)
           + S * 3 * H * 2          # qkv scratch (bf16)
           + 2 * H * 3 * H * 2      # Wqkv (bf16)
           + 2 * H * H * 2          # Wo (bf16)
           + 2 * tq * H * 4         # output tile
           + 4 * tq * S * 4)        # live score / prob tiles
    vmem_limit = int(min(max(32 * 1024 * 1024, 2 * est), 64 * 1024 * 1024))

    return pl.pallas_call(
        kern,
        out_shape=jax.ShapeDtypeStruct((B, S, H), x.dtype),
        grid=(B, n_q),
        in_specs=[
            pl.BlockSpec((None, S, H), lambda b, q: (b, 0, 0)),   # x  (DMA'd once per batch)
            pl.BlockSpec((None, 1, S), lambda b, q: (b, 0, 0)),   # additive mask
            const2((H, 3 * H)),                                   # Wqkv  (VMEM-resident)
            const2((1, 3 * H)),                                   # bqkv
            const2((H, H)),                                       # Wo
            const2((1, H)), const2((1, H)), const2((1, H)),       # bo, gamma, beta
        ],
        out_specs=pl.BlockSpec((None, tq, H), lambda b, q: (b, q, 0)),
        scratch_shapes=[pltpu.VMEM((S, 3 * H), bf)],              # per-batch QKV cache
        compiler_params=pltpu.CompilerParams(
            dimension_semantics=("parallel", "arbitrary"),
            vmem_limit_bytes=vmem_limit),
    )(x, mask, wqkv, bqkv, wo, bo, gamma, beta)


def _reference(x, attention_mask, params, *, n_heads, layer_norm_eps):
    """Pure-JAX f32 reference mirroring the PyTorch forward (dropout = identity)."""
    B, S, H = x.shape
    D = H // n_heads

    def lin(v, w, b):
        return v @ w + b

    q = lin(x, params["wq"], params["bq"]).reshape(B, S, n_heads, D).transpose(0, 2, 1, 3)
    k = lin(x, params["wk"], params["bk"]).reshape(B, S, n_heads, D).transpose(0, 2, 1, 3)
    v = lin(x, params["wv"], params["bv"]).reshape(B, S, n_heads, D).transpose(0, 2, 1, 3)

    scores = jnp.einsum("bhqd,bhkd->bhqk", q, k) / math.sqrt(D)
    scores = scores + attention_mask
    probs = jax.nn.softmax(scores, axis=-1)
    ctx = jnp.einsum("bhqk,bhkd->bhqd", probs, v).transpose(0, 2, 1, 3).reshape(B, S, H)
    hidden = lin(ctx, params["wo"], params["bo"]) + x
    mean = hidden.mean(-1, keepdims=True)
    var = ((hidden - mean) ** 2).mean(-1, keepdims=True)
    return (hidden - mean) / jnp.sqrt(var + layer_norm_eps) * params["gamma"] + params["beta"]


if __name__ == "__main__":
    B, S, H = 2, 8, 32
    n_heads = 4
    layer_norm_eps = 1e-12

    key = jax.random.PRNGKey(0)
    keys = jax.random.split(key, 12)

    def w(k):
        return jax.random.normal(k, (H, H), jnp.float32) * 0.05

    params = {
        "wq": w(keys[0]), "bq": jax.random.normal(keys[1], (H,), jnp.float32) * 0.01,
        "wk": w(keys[2]), "bk": jax.random.normal(keys[3], (H,), jnp.float32) * 0.01,
        "wv": w(keys[4]), "bv": jax.random.normal(keys[5], (H,), jnp.float32) * 0.01,
        "wo": w(keys[6]), "bo": jax.random.normal(keys[7], (H,), jnp.float32) * 0.01,
        "gamma": jnp.ones((H,), jnp.float32),
        "beta": jnp.zeros((H,), jnp.float32),
    }

    x = jax.random.normal(keys[8], (B, S, H), jnp.float32)
    # additive attention mask: 0 for attended positions, -10000 for masked ones
    keep = (jax.random.uniform(keys[9], (B, 1, 1, S)) > 0.2).astype(jnp.float32)
    attention_mask = (1.0 - keep) * -10000.0

    out = multi_head_attention(x, attention_mask, params,
                               n_heads=n_heads, layer_norm_eps=layer_norm_eps)
    out = jax.block_until_ready(out)

    ref = _reference(x, attention_mask, params,
                     n_heads=n_heads, layer_norm_eps=layer_norm_eps)
    assert out.shape == (B, S, H)
    # bf16 MXU matmuls (f32 accumulation), bf16 QKV cache, approx reciprocal =>
    # relaxed tolerance vs. the pure-f32 reference.
    err = float(jnp.max(jnp.abs(out - ref)))
    assert jnp.allclose(out, ref, atol=2e-2, rtol=2e-2), f"mismatch vs reference, max|err|={err}"

    print("KERNEL_OK")
</pallas_src>

<mosaic_0001>
module attributes {stable_mosaic.version = 11 : i64} {
  func.func @_mha_kernel(%arg0: i32, %arg1: i32, %arg2: memref<1x8x32xf32, #tpu.memory_space<vmem>>, %arg3: memref<1x1x8xf32, #tpu.memory_space<vmem>>, %arg4: memref<32x96xbf16, #tpu.memory_space<vmem>>, %arg5: memref<1x96xf32, #tpu.memory_space<vmem>>, %arg6: memref<32x32xbf16, #tpu.memory_space<vmem>>, %arg7: memref<1x32xf32, #tpu.memory_space<vmem>>, %arg8: memref<1x32xf32, #tpu.memory_space<vmem>>, %arg9: memref<1x32xf32, #tpu.memory_space<vmem>>, %arg10: memref<1x8x32xf32, #tpu.memory_space<vmem>>, %arg11: memref<8x96xbf16, #tpu.memory_space<vmem>>) attributes {dimension_semantics = [#tpu.dimension_semantics<parallel>, #tpu.dimension_semantics<arbitrary>], iteration_bounds = array<i64: 2, 1>, scalar_prefetch = 0 : i64, scratch_operands = 1 : i64, tpu.core_type = #tpu.core_type<tc>, window_params = [{transform_indices = @transform_0, window_bounds = array<i64: 1, 8, 32>}, {transform_indices = @transform_1, window_bounds = array<i64: 1, 1, 8>}, {pipeline_mode = #tpu.pipeline_mode<synchronous>, transform_indices = @transform_2, window_bounds = array<i64: 32, 96>}, {pipeline_mode = #tpu.pipeline_mode<synchronous>, transform_indices = @transform_3, window_bounds = array<i64: 1, 96>}, {pipeline_mode = #tpu.pipeline_mode<synchronous>, transform_indices = @transform_4, window_bounds = array<i64: 32, 32>}, {pipeline_mode = #tpu.pipeline_mode<synchronous>, transform_indices = @transform_5, window_bounds = array<i64: 1, 32>}, {pipeline_mode = #tpu.pipeline_mode<synchronous>, transform_indices = @transform_6, window_bounds = array<i64: 1, 32>}, {pipeline_mode = #tpu.pipeline_mode<synchronous>, transform_indices = @transform_7, window_bounds = array<i64: 1, 32>}, {transform_indices = @transform_8, window_bounds = array<i64: 1, 8, 32>}]} {
    %c0_i32 = arith.constant 0 : i32
    %0 = arith.cmpi eq, %arg1, %c0_i32 : i32
    %1 = arith.extui %0 : i1 to i32
    %c0_i32_0 = arith.constant 0 : i32
    %2 = arith.cmpi ne, %1, %c0_i32_0 : i32
    scf.if %2 {
      %c0_40 = arith.constant 0 : index
      %c0_41 = arith.constant 0 : index
      %c0_42 = arith.constant 0 : index
      %121 = vector.load %arg2[%c0_40, %c0_41, %c0_42] : memref<1x8x32xf32, #tpu.memory_space<vmem>>, vector<1x8x32xf32>
      %122 = vector.shape_cast %121 : vector<1x8x32xf32> to vector<8x32xf32>
      %123 = arith.truncf %122 : vector<8x32xf32> to vector<8x32xbf16>
      %c0_43 = arith.constant 0 : index
      %c0_44 = arith.constant 0 : index
      %124 = vector.load %arg4[%c0_43, %c0_44] : memref<32x96xbf16, #tpu.memory_space<vmem>>, vector<32x96xbf16>
      %cst_45 = arith.constant dense<0.000000e+00> : vector<8x96xf32>
      %125 = tpu.matmul %123, %124, %cst_45 {dimension_numbers = #tpu.dot_dimension_numbers<[1], [0], [0], [1], [0, 0, 1, 1], [], []>} : vector<8x32xbf16>, vector<32x96xbf16>, vector<8x96xf32> -> vector<8x96xf32>
      %c0_46 = arith.constant 0 : index
      %c0_47 = arith.constant 0 : index
      %126 = vector.load %arg5[%c0_46, %c0_47] : memref<1x96xf32, #tpu.memory_space<vmem>>, vector<1x96xf32>
      %127 = vector.broadcast %126 : vector<1x96xf32> to vector<8x96xf32>
      %128 = arith.addf %125, %127 : vector<8x96xf32>
      %129 = arith.truncf %128 : vector<8x96xf32> to vector<8x96xbf16>
      %c0_48 = arith.constant 0 : index
      %c0_49 = arith.constant 0 : index
      %130 = vector.load %arg11[%c0_48, %c0_49] : memref<8x96xbf16, #tpu.memory_space<vmem>>, vector<8x96xbf16>
      tpu.vector_store %arg11[%c0_48, %c0_49], %129 {strides = array<i32>} : memref<8x96xbf16, #tpu.memory_space<vmem>>, vector<8x96xbf16>,
    } else {
    }
    %c8_i32 = arith.constant 8 : i32
    %3 = arith.muli %arg1, %c8_i32 : i32
    %4 = tpu.assume_multiple %3, 8 : i32
    %5 = arith.index_cast %4 : i32 to index
    %c0 = arith.constant 0 : index
    %6 = vector.load %arg11[%5, %c0] : memref<8x96xbf16, #tpu.memory_space<vmem>>, vector<8x96xbf16>
    %c0_1 = arith.constant 0 : index
    %c32 = arith.constant 32 : index
    %7 = vector.load %arg11[%c0_1, %c32] : memref<8x96xbf16, #tpu.memory_space<vmem>>, vector<8x32xbf16>
    %c0_2 = arith.constant 0 : index
    %c64 = arith.constant 64 : index
    %8 = vector.load %arg11[%c0_2, %c64] : memref<8x96xbf16, #tpu.memory_space<vmem>>, vector<8x32xbf16>
    %c0_3 = arith.constant 0 : index
    %c0_4 = arith.constant 0 : index
    %c0_5 = arith.constant 0 : index
    %9 = vector.load %arg3[%c0_3, %c0_4, %c0_5] : memref<1x1x8xf32, #tpu.memory_space<vmem>>, vector<1x1x8xf32>
    %10 = vector.shape_cast %9 : vector<1x1x8xf32> to vector<1x8xf32>
    %11 = vector.extract_strided_slice %6 {offsets = [0, 0], sizes = [8, 8], strides = [1, 1]} : vector<8x96xbf16> to vector<8x8xbf16>
    %12 = vector.extract_strided_slice %7 {offsets = [0, 0], sizes = [8, 8], strides = [1, 1]} : vector<8x32xbf16> to vector<8x8xbf16>
    %13 = vector.extract_strided_slice %8 {offsets = [0, 0], sizes = [8, 8], strides = [1, 1]} : vector<8x32xbf16> to vector<8x8xbf16>
    %cst = arith.constant dense<0.000000e+00> : vector<8x8xf32>
    %14 = tpu.matmul %11, %12, %cst {dimension_numbers = #tpu.dot_dimension_numbers<[1], [1], [0], [0], [0, 0, 1, 0], [], []>} : vector<8x8xbf16>, vector<8x8xbf16>, vector<8x8xf32> -> vector<8x8xf32>
    %15 = vector.broadcast %10 : vector<1x8xf32> to vector<8x8xf32>
    %16 = arith.addf %14, %15 : vector<8x8xf32>
    %cst_6 = arith.constant dense<0xFF800000> : vector<8xf32>
    %17 = vector.multi_reduction <maximumf>, %16, %cst_6 [1] : vector<8x8xf32> to vector<8xf32>
    %18 = vector.shape_cast %17 : vector<8xf32> to vector<8x1xf32>
    %19 = vector.broadcast %18 : vector<8x1xf32> to vector<8x8xf32>
    %20 = arith.subf %16, %19 : vector<8x8xf32>
    %21 = math.exp %20 : vector<8x8xf32>
    %cst_7 = arith.constant dense<0.000000e+00> : vector<8xf32>
    %22 = vector.multi_reduction <add>, %21, %cst_7 [1] : vector<8x8xf32> to vector<8xf32>
    %23 = vector.shape_cast %22 : vector<8xf32> to vector<8x1xf32>
    %24 = arith.truncf %21 : vector<8x8xf32> to vector<8x8xbf16>
    %cst_8 = arith.constant dense<0.000000e+00> : vector<8x8xf32>
    %25 = tpu.matmul %24, %13, %cst_8 {dimension_numbers = #tpu.dot_dimension_numbers<[1], [0], [0], [1], [0, 0, 1, 1], [], []>} : vector<8x8xbf16>, vector<8x8xbf16>, vector<8x8xf32> -> vector<8x8xf32>
    %26 = tpu.reciprocal %23 {approx = true} : vector<8x1xf32> -> vector<8x1xf32>
    %27 = vector.broadcast %26 : vector<8x1xf32> to vector<8x8xf32>
    %28 = arith.mulf %25, %27 : vector<8x8xf32>
    %29 = vector.extract_strided_slice %6 {offsets = [0, 8], sizes = [8, 8], strides = [1, 1]} : vector<8x96xbf16> to vector<8x8xbf16>
    %30 = vector.extract_strided_slice %7 {offsets = [0, 8], sizes = [8, 8], strides = [1, 1]} : vector<8x32xbf16> to vector<8x8xbf16>
    %31 = vector.extract_strided_slice %8 {offsets = [0, 8], sizes = [8, 8], strides = [1, 1]} : vector<8x32xbf16> to vector<8x8xbf16>
    %cst_9 = arith.constant dense<0.000000e+00> : vector<8x8xf32>
    %32 = tpu.matmul %29, %30, %cst_9 {dimension_numbers = #tpu.dot_dimension_numbers<[1], [1], [0], [0], [0, 0, 1, 0], [], []>} : vector<8x8xbf16>, vector<8x8xbf16>, vector<8x8xf32> -> vector<8x8xf32>
    %33 = vector.broadcast %10 : vector<1x8xf32> to vector<8x8xf32>
    %34 = arith.addf %32, %33 : vector<8x8xf32>
    %cst_10 = arith.constant dense<0xFF800000> : vector<8xf32>
    %35 = vector.multi_reduction <maximumf>, %34, %cst_10 [1] : vector<8x8xf32> to vector<8xf32>
    %36 = vector.shape_cast %35 : vector<8xf32> to vector<8x1xf32>
    %37 = vector.broadcast %36 : vector<8x1xf32> to vector<8x8xf32>
    %38 = arith.subf %34, %37 : vector<8x8xf32>
    %39 = math.exp %38 : vector<8x8xf32>
    %cst_11 = arith.constant dense<0.000000e+00> : vector<8xf32>
    %40 = vector.multi_reduction <add>, %39, %cst_11 [1] : vector<8x8xf32> to vector<8xf32>
    %41 = vector.shape_cast %40 : vector<8xf32> to vector<8x1xf32>
    %42 = arith.truncf %39 : vector<8x8xf32> to vector<8x8xbf16>
    %cst_12 = arith.constant dense<0.000000e+00> : vector<8x8xf32>
    %43 = tpu.matmul %42, %31, %cst_12 {dimension_numbers = #tpu.dot_dimension_numbers<[1], [0], [0], [1], [0, 0, 1, 1], [], []>} : vector<8x8xbf16>, vector<8x8xbf16>, vector<8x8xf32> -> vector<8x8xf32>
    %44 = tpu.reciprocal %41 {approx = true} : vector<8x1xf32> -> vector<8x1xf32>
    %45 = vector.broadcast %44 : vector<8x1xf32> to vector<8x8xf32>
    %46 = arith.mulf %43, %45 : vector<8x8xf32>
    %47 = vector.extract_strided_slice %6 {offsets = [0, 16], sizes = [8, 8], strides = [1, 1]} : vector<8x96xbf16> to vector<8x8xbf16>
    %48 = vector.extract_strided_slice %7 {offsets = [0, 16], sizes = [8, 8], strides = [1, 1]} : vector<8x32xbf16> to vector<8x8xbf16>
    %49 = vector.extract_strided_slice %8 {offsets = [0, 16], sizes = [8, 8], strides = [1, 1]} : vector<8x32xbf16> to vector<8x8xbf16>
    %cst_13 = arith.constant dense<0.000000e+00> : vector<8x8xf32>
    %50 = tpu.matmul %47, %48, %cst_13 {dimension_numbers = #tpu.dot_dimension_numbers<[1], [1], [0], [0], [0, 0, 1, 0], [], []>} : vector<8x8xbf16>, vector<8x8xbf16>, vector<8x8xf32> -> vector<8x8xf32>
    %51 = vector.broadcast %10 : vector<1x8xf32> to vector<8x8xf32>
    %52 = arith.addf %50, %51 : vector<8x8xf32>
    %cst_14 = arith.constant dense<0xFF800000> : vector<8xf32>
    %53 = vector.multi_reduction <maximumf>, %52, %cst_14 [1] : vector<8x8xf32> to vector<8xf32>
    %54 = vector.shape_cast %53 : vector<8xf32> to vector<8x1xf32>
    %55 = vector.broadcast %54 : vector<8x1xf32> to vector<8x8xf32>
    %56 = arith.subf %52, %55 : vector<8x8xf32>
    %57 = math.exp %56 : vector<8x8xf32>
    %cst_15 = arith.constant dense<0.000000e+00> : vector<8xf32>
    %58 = vector.multi_reduction <add>, %57, %cst_15 [1] : vector<8x8xf32> to vector<8xf32>
    %59 = vector.shape_cast %58 : vector<8xf32> to vector<8x1xf32>
    %60 = arith.truncf %57 : vector<8x8xf32> to vector<8x8xbf16>
    %cst_16 = arith.constant dense<0.000000e+00> : vector<8x8xf32>
    %61 = tpu.matmul %60, %49, %cst_16 {dimension_numbers = #tpu.dot_dimension_numbers<[1], [0], [0], [1], [0, 0, 1, 1], [], []>} : vector<8x8xbf16>, vector<8x8xbf16>, vector<8x8xf32> -> vector<8x8xf32>
    %62 = tpu.reciprocal %59 {approx = true} : vector<8x1xf32> -> vector<8x1xf32>
    %63 = vector.broadcast %62 : vector<8x1xf32> to vector<8x8xf32>
    %64 = arith.mulf %61, %63 : vector<8x8xf32>
    %65 = vector.extract_strided_slice %6 {offsets = [0, 24], sizes = [8, 8], strides = [1, 1]} : vector<8x96xbf16> to vector<8x8xbf16>
    %66 = vector.extract_strided_slice %7 {offsets = [0, 24], sizes = [8, 8], strides = [1, 1]} : vector<8x32xbf16> to vector<8x8xbf16>
    %67 = vector.extract_strided_slice %8 {offsets = [0, 24], sizes = [8, 8], strides = [1, 1]} : vector<8x32xbf16> to vector<8x8xbf16>
    %cst_17 = arith.constant dense<0.000000e+00> : vector<8x8xf32>
    %68 = tpu.matmul %65, %66, %cst_17 {dimension_numbers = #tpu.dot_dimension_numbers<[1], [1], [0], [0], [0, 0, 1, 0], [], []>} : vector<8x8xbf16>, vector<8x8xbf16>, vector<8x8xf32> -> vector<8x8xf32>
    %69 = vector.broadcast %10 : vector<1x8xf32> to vector<8x8xf32>
    %70 = arith.addf %68, %69 : vector<8x8xf32>
    %cst_18 = arith.constant dense<0xFF800000> : vector<8xf32>
    %71 = vector.multi_reduction <maximumf>, %70, %cst_18 [1] : vector<8x8xf32> to vector<8xf32>
    %72 = vector.shape_cast %71 : vector<8xf32> to vector<8x1xf32>
    %73 = vector.broadcast %72 : vector<8x1xf32> to vector<8x8xf32>
    %74 = arith.subf %70, %73 : vector<8x8xf32>
    %75 = math.exp %74 : vector<8x8xf32>
    %cst_19 = arith.constant dense<0.000000e+00> : vector<8xf32>
    %76 = vector.multi_reduction <add>, %75, %cst_19 [1] : vector<8x8xf32> to vector<8xf32>
    %77 = vector.shape_cast %76 : vector<8xf32> to vector<8x1xf32>
    %78 = arith.truncf %75 : vector<8x8xf32> to vector<8x8xbf16>
    %cst_20 = arith.constant dense<0.000000e+00> : vector<8x8xf32>
    %79 = tpu.matmul %78, %67, %cst_20 {dimension_numbers = #tpu.dot_dimension_numbers<[1], [0], [0], [1], [0, 0, 1, 1], [], []>} : vector<8x8xbf16>, vector<8x8xbf16>, vector<8x8xf32> -> vector<8x8xf32>
    %80 = tpu.reciprocal %77 {approx = true} : vector<8x1xf32> -> vector<8x1xf32>
    %81 = vector.broadcast %80 : vector<8x1xf32> to vector<8x8xf32>
    %82 = arith.mulf %79, %81 : vector<8x8xf32>
    %83 = tpu.concatenate %28, %46, %64, %82 in 1 : vector<8x8xf32>, vector<8x8xf32>, vector<8x8xf32>, vector<8x8xf32> -> vector<8x32xf32>
    %84 = arith.truncf %83 : vector<8x32xf32> to vector<8x32xbf16>
    %c0_21 = arith.constant 0 : index
    %c0_22 = arith.constant 0 : index
    %85 = vector.load %arg6[%c0_21, %c0_22] : memref<32x32xbf16, #tpu.memory_space<vmem>>, vector<32x32xbf16>
    %cst_23 = arith.constant dense<0.000000e+00> : vector<8x32xf32>
    %86 = tpu.matmul %84, %85, %cst_23 {dimension_numbers = #tpu.dot_dimension_numbers<[1], [0], [0], [1], [0, 0, 1, 1], [], []>} : vector<8x32xbf16>, vector<32x32xbf16>, vector<8x32xf32> -> vector<8x32xf32>
    %c0_24 = arith.constant 0 : index
    %87 = arith.index_cast %4 : i32 to index
    %c0_25 = arith.constant 0 : index
    %88 = vector.load %arg2[%c0_24, %87, %c0_25] : memref<1x8x32xf32, #tpu.memory_space<vmem>>, vector<1x8x32xf32>
    %89 = vector.shape_cast %88 : vector<1x8x32xf32> to vector<8x32xf32>
    %c0_26 = arith.constant 0 : index
    %c0_27 = arith.constant 0 : index
    %90 = vector.load %arg7[%c0_26, %c0_27] : memref<1x32xf32, #tpu.memory_space<vmem>>, vector<1x32xf32>
    %91 = vector.broadcast %90 : vector<1x32xf32> to vector<8x32xf32>
    %92 = arith.addf %86, %91 : vector<8x32xf32>
    %93 = arith.addf %92, %89 : vector<8x32xf32>
    %cst_28 = arith.constant dense<0.000000e+00> : vector<8xf32>
    %94 = vector.multi_reduction <add>, %93, %cst_28 [1] : vector<8x32xf32> to vector<8xf32>
    %95 = vector.shape_cast %94 : vector<8xf32> to vector<8x1xf32>
    %cst_29 = arith.constant 3.200000e+01 : f32
    %96 = vector.broadcast %cst_29 : f32 to vector<8x1xf32>
    %97 = arith.divf %95, %96 : vector<8x1xf32>
    %98 = vector.broadcast %97 : vector<8x1xf32> to vector<8x32xf32>
    %99 = arith.subf %93, %98 : vector<8x32xf32>
    %100 = arith.mulf %99, %99 : vector<8x32xf32>
    %cst_30 = arith.constant dense<0.000000e+00> : vector<8xf32>
    %101 = vector.multi_reduction <add>, %100, %cst_30 [1] : vector<8x32xf32> to vector<8xf32>
    %102 = vector.shape_cast %101 : vector<8xf32> to vector<8x1xf32>
    %cst_31 = arith.constant 3.200000e+01 : f32
    %103 = vector.broadcast %cst_31 : f32 to vector<8x1xf32>
    %104 = arith.divf %102, %103 : vector<8x1xf32>
    %105 = vector.broadcast %97 : vector<8x1xf32> to vector<8x32xf32>
    %106 = arith.subf %93, %105 : vector<8x32xf32>
    %cst_32 = arith.constant 9.99999996E-13 : f32
    %107 = vector.broadcast %cst_32 : f32 to vector<8x1xf32>
    %108 = arith.addf %104, %107 : vector<8x1xf32>
    %109 = math.rsqrt %108 : vector<8x1xf32>
    %110 = vector.broadcast %109 : vector<8x1xf32> to vector<8x32xf32>
    %111 = arith.mulf %106, %110 : vector<8x32xf32>
    %c0_33 = arith.constant 0 : index
    %c0_34 = arith.constant 0 : index
    %112 = vector.load %arg8[%c0_33, %c0_34] : memref<1x32xf32, #tpu.memory_space<vmem>>, vector<1x32xf32>
    %113 = vector.broadcast %112 : vector<1x32xf32> to vector<8x32xf32>
    %114 = arith.mulf %111, %113 : vector<8x32xf32>
    %c0_35 = arith.constant 0 : index
    %c0_36 = arith.constant 0 : index
    %115 = vector.load %arg9[%c0_35, %c0_36] : memref<1x32xf32, #tpu.memory_space<vmem>>, vector<1x32xf32>
    %116 = vector.broadcast %115 : vector<1x32xf32> to vector<8x32xf32>
    %117 = arith.addf %114, %116 : vector<8x32xf32>
    %c0_37 = arith.constant 0 : index
    %c0_38 = arith.constant 0 : index
    %c0_39 = arith.constant 0 : index
    %118 = vector.load %arg10[%c0_37, %c0_38, %c0_39] : memref<1x8x32xf32, #tpu.memory_space<vmem>>, vector<1x8x32xf32>
    %119 = vector.shape_cast %118 : vector<1x8x32xf32> to vector<8x32xf32>
    %120 = vector.shape_cast %117 : vector<8x32xf32> to vector<1x8x32xf32>
    tpu.vector_store %arg10[%c0_37, %c0_38, %c0_39], %120 {strides = array<i32>} : memref<1x8x32xf32, #tpu.memory_space<vmem>>, vector<1x8x32xf32>,
    return
  }
  func.func @transform_0(%arg0: i32, %arg1: i32) -> (i32, i32, i32) {
    %c0_i32 = arith.constant 0 : i32
    %c0_i32_0 = arith.constant 0 : i32
    %c0_i32_1 = arith.constant 0 : i32
    return %arg0, %c0_i32, %c0_i32_0 : i32, i32, i32
  }
  func.func @transform_1(%arg0: i32, %arg1: i32) -> (i32, i32, i32) {
    %c0_i32 = arith.constant 0 : i32
    %c0_i32_0 = arith.constant 0 : i32
    %c0_i32_1 = arith.constant 0 : i32
    return %arg0, %c0_i32, %c0_i32_0 : i32, i32, i32
  }
  func.func @transform_2(%arg0: i32, %arg1: i32) -> (i32, i32) {
    %c0_i32 = arith.constant 0 : i32
    %c0_i32_0 = arith.constant 0 : i32
    %c0_i32_1 = arith.constant 0 : i32
    return %c0_i32, %c0_i32_0 : i32, i32
  }
  func.func @transform_3(%arg0: i32, %arg1: i32) -> (i32, i32) {
    %c0_i32 = arith.constant 0 : i32
    %c0_i32_0 = arith.constant 0 : i32
    %c0_i32_1 = arith.constant 0 : i32
    return %c0_i32, %c0_i32_0 : i32, i32
  }
  func.func @transform_4(%arg0: i32, %arg1: i32) -> (i32, i32) {
    %c0_i32 = arith.constant 0 : i32
    %c0_i32_0 = arith.constant 0 : i32
    %c0_i32_1 = arith.constant 0 : i32
    return %c0_i32, %c0_i32_0 : i32, i32
  }
  func.func @transform_5(%arg0: i32, %arg1: i32) -> (i32, i32) {
    %c0_i32 = arith.constant 0 : i32
    %c0_i32_0 = arith.constant 0 : i32
    %c0_i32_1 = arith.constant 0 : i32
    return %c0_i32, %c0_i32_0 : i32, i32
  }
  func.func @transform_6(%arg0: i32, %arg1: i32) -> (i32, i32) {
    %c0_i32 = arith.constant 0 : i32
    %c0_i32_0 = arith.constant 0 : i32
    %c0_i32_1 = arith.constant 0 : i32
    return %c0_i32, %c0_i32_0 : i32, i32
  }
  func.func @transform_7(%arg0: i32, %arg1: i32) -> (i32, i32) {
    %c0_i32 = arith.constant 0 : i32
    %c0_i32_0 = arith.constant 0 : i32
    %c0_i32_1 = arith.constant 0 : i32
    return %c0_i32, %c0_i32_0 : i32, i32
  }
  func.func @transform_8(%arg0: i32, %arg1: i32) -> (i32, i32, i32) {
    %c0_i32 = arith.constant 0 : i32
    %c0_i32_0 = arith.constant 0 : i32
    return %arg0, %arg1, %c0_i32 : i32, i32, i32
  }
}

</mosaic_0001>

<llo_original>
// kernel: tpu_custom_call.1
$region0: #{tpu_custom_call.1}
  #allocation0 [shape = 'u32[]', space=smem, size = 0x4, offset = 0x4, fixed_abs, tag = 'smem constant byte address 0x4 - core index']
  #allocation1 [shape = 'u32[144,128]{1,0:T(1,128)}', space=vmem, size = 0x12000, scoped, tag = 'internal scratch']
  #allocation2 [shape = 'bf16[8,96]{1,0:T(8,128)(2,1)}', space=vmem, size = 0x800, scoped, tag = 'scratch operand']
  %s0 = inlined_call_operand.hbm [shape: f32[2,8,32], index: 0, kind: input, shape index: {}]
  %s1 = inlined_call_operand.vmem [shape: f32[2,1,8], index: 1, kind: input, shape index: {}]
  %s2 = inlined_call_operand.hbm [shape: bf16[32,96], index: 2, kind: input, shape index: {}]
  %s3 = inlined_call_operand.vmem [shape: f32[1,96], index: 3, kind: input, shape index: {}]
  %s4 = inlined_call_operand.hbm [shape: bf16[32,32], index: 4, kind: input, shape index: {}]
  %s5 = inlined_call_operand.vmem [shape: f32[1,32], index: 5, kind: input, shape index: {}]
  %s6 = inlined_call_operand.vmem [shape: f32[1,32], index: 6, kind: input, shape index: {}]
  %s7 = inlined_call_operand.vmem [shape: f32[1,32], index: 7, kind: input, shape index: {}]
  %s8 = inlined_call_operand.hbm [shape: f32[2,8,32], index: 8, kind: output, shape index: {}]
  %s9 = sld [smem:[#allocation0]]
  $region81: #{tpu_custom_call.1} parent=0
    _
  %s11 = ssub.s32 1, %s9
  %s12 = scalar_select 0, %s11, %s9
  $region1: #{tpu_custom_call.1} parent=0
    #allocation3 [shape = 'u8[8192]{0}', space=vmem, size = 0x2000, scoped, tag = 'input window, operand 0']
    #allocation4 [shape = 's32[2]{0}', space=sflag, size = 0x8, scoped, tag = 'scoped memory for tpu_custom_call.1']
    #allocation5 [shape = 's32[2]{0}', space=sflag, size = 0x8, scoped, tag = 'scoped memory for tpu_custom_call.1']
    #allocation6 [shape = 'u8[8192]{0}', space=vmem, size = 0x2000, scoped, tag = 'input window, operand 2, single buffered']
    #allocation7 [shape = 's32[1]{0}', space=sflag, size = 0x4, scoped, tag = 'scoped memory for tpu_custom_call.1']
    #allocation8 [shape = 'u8[8192]{0}', space=vmem, size = 0x2000, scoped, tag = 'input window, operand 4, single buffered']
    #allocation9 [shape = 'u8[8192]{0}', space=vmem, size = 0x2000, scoped, tag = 'output window, operand 0']
    %13 = vsyncpa [#allocation4], 0
    %s14 = scalar_lea.sflag [#allocation4], 1
    %15 = vsyncpa %s14, 0
    %16 = vsyncpa [#allocation7], 0
    %17 = vsyncpa [#allocation5], 0
    %s18 = scalar_lea.sflag [#allocation5], 1
    %19 = vsyncpa %s18, 0
    loop: start=0, step=1, limit=4
    $region2: #{tpu_custom_call.1} parent=1 // loop_pre_header
      _
    $region3: #{tpu_custom_call.1} parent=1 // loop_header
      %s21 = sphi 0, %s25
      %p22 = scmp.ge.s32.totalorder %s21, 4
      %s28 = sphi 0, %s40
      %s29 = sphi 0, %s36
      %s30 = sphi 0, %s28
      %s31 = sphi 0, %s29
      %s32 = sphi 0, %s30
      %s33 = sphi 0, %s31
      %s43 = sphi 0, %s45
      %s46 = sphi 0, %s43
      %s47 = sphi 0, %s46
      %s63 = sphi 0, %s47
      %s69 = sphi 0, %s71
      %s72 = sphi 0, %s69
      %s73 = sphi 0, %s72
      %s89 = sphi 0, %s73
      %s93 = sphi 0, %s93
      %s95 = sphi 0, %s93
      %s96 = sphi 0, %s95
      %s110 = sphi 0, %s96
      %s114 = sphi 0, %s114
      %s116 = sphi 0, %s114
      %s117 = sphi 0, %s116
      %s131 = sphi 0, %s117
      %s135 = sphi 0, %s135
      %s137 = sphi 0, %s135
      %s138 = sphi 0, %s137
      %s152 = sphi 0, %s138
      %s156 = sphi 0, %s156
      %s158 = sphi 0, %s156
      %s159 = sphi 0, %s158
      %s173 = sphi 0, %s159
      %s177 = sphi 0, %s177
      %s179 = sphi 0, %s177
      %s180 = sphi 0, %s179
      %s194 = sphi 0, %s180
      %s198 = sphi 0, %s198
      %s200 = sphi 0, %s198
      %s201 = sphi 0, %s200
      %s215 = sphi 0, %s201
      %s223 = sphi 0, %s225
      %s226 = sphi 0, %s223
      %s227 = sphi 0, %s226
      %s243 = sphi 0, %s227
    $region4: #{tpu_custom_call.1} parent=1 // loop_header_branch
      %24 = sbr.rel (%p22) target = $region8
    $region5: #{tpu_custom_call.1} parent=1 // loop_body
      %s26 = ssub.s32 %s21, 1
      %s27 = ssub.s32 %s21, 2
      %s34 = sadd.s32 1, %s29
      %p35 = scmp.ge.s32.totalorder %s34, 1
      %s36 = scalar_select %p35, 0, %s34
      %s37 = sadd.s32 1, %s28
      %s38 = scalar_select %p35, %s37, %s28
      %p39 = scmp.ge.s32.totalorder %s38, 2
      %s40 = scalar_select %p39, 0, %s38
      %s41 = ssub.s32 %s28, %s40
      %p42 = scmp.eq.s32.totalorder %s41, 0
      %s44 = sadd.s32 %s43, 1
      %s45 = scalar_select %p42, %s43, %s44
      %p48 = pneg %p42
      %p49 = scmp.eq.s32.totalorder %s21, 1
      %p50 = por %p48, %p49
      %p51 = scmp.ne.s32.totalorder %s43, %s46
      %p52 = scmp.eq.s32.totalorder %s21, 0
      %p53 = por %p51, %p52
      %p54 = scmp.ne.s32.totalorder %s43, %s46
      %p55 = scmp.eq.s32.totalorder %s26, 1
      %p56 = por %p54, %p55
      %p57 = scmp.ne.s32.totalorder %s46, %s47
      %p58 = scmp.eq.s32.totalorder %s26, 0
      %p59 = por %p57, %p58
      %p60 = scmp.ne.s32.totalorder %s46, %s47
      %p61 = scmp.eq.s32.totalorder %s27, 1
      %p62 = por %p60, %p61
      %p64 = scmp.ne.s32.totalorder %s47, %s63
      %p65 = scmp.eq.s32.totalorder %s27, 0
      %p66 = por %p64, %p65
      %s67 = ssub.s32 %s28, %s40
      %p68 = scmp.eq.s32.totalorder %s67, 0
      %s70 = sadd.s32 %s69, 1
      %s71 = scalar_select %p68, %s69, %s70
      %p74 = pneg %p68
      %p75 = scmp.eq.s32.totalorder %s21, 1
      %p76 = por %p74, %p75
      %p77 = scmp.ne.s32.totalorder %s69, %s72
      %p78 = scmp.eq.s32.totalorder %s21, 0
      %p79 = por %p77, %p78
      %p80 = scmp.ne.s32.totalorder %s69, %s72
      %p81 = scmp.eq.s32.totalorder %s26, 1
      %p82 = por %p80, %p81
      %p83 = scmp.ne.s32.totalorder %s72, %s73
      %p84 = scmp.eq.s32.totalorder %s26, 0
      %p85 = por %p83, %p84
      %p86 = scmp.ne.s32.totalorder %s72, %s73
      %p87 = scmp.eq.s32.totalorder %s27, 1
      %p88 = por %p86, %p87
      %p90 = scmp.ne.s32.totalorder %s73, %s89
      %p91 = scmp.eq.s32.totalorder %s27, 0
      %p92 = por %p90, %p91
      %s94 = sadd.s32 %s93, 1
      %p97 = scmp.eq.s32.totalorder %s21, 1
      %p98 = scmp.ne.s32.totalorder %s93, %s95
      %p99 = scmp.eq.s32.totalorder %s21, 0
      %p100 = por %p98, %p99
      %p101 = scmp.ne.s32.totalorder %s93, %s95
      %p102 = scmp.eq.s32.totalorder %s26, 1
      %p103 = por %p101, %p102
      %p104 = scmp.ne.s32.totalorder %s95, %s96
      %p105 = scmp.eq.s32.totalorder %s26, 0
      %p106 = por %p104, %p105
      %p107 = scmp.ne.s32.totalorder %s95, %s96
      %p108 = scmp.eq.s32.totalorder %s27, 1
      %p109 = por %p107, %p108
      %p111 = scmp.ne.s32.totalorder %s96, %s110
      %p112 = scmp.eq.s32.totalorder %s27, 0
      %p113 = por %p111, %p112
      %s115 = sadd.s32 %s114, 1
      %p118 = scmp.eq.s32.totalorder %s21, 1
      %p119 = scmp.ne.s32.totalorder %s114, %s116
      %p120 = scmp.eq.s32.totalorder %s21, 0
      %p121 = por %p119, %p120
      %p122 = scmp.ne.s32.totalorder %s114, %s116
      %p123 = scmp.eq.s32.totalorder %s26, 1
      %p124 = por %p122, %p123
      %p125 = scmp.ne.s32.totalorder %s116, %s117
      %p126 = scmp.eq.s32.totalorder %s26, 0
      %p127 = por %p125, %p126
      %p128 = scmp.ne.s32.totalorder %s116, %s117
      %p129 = scmp.eq.s32.totalorder %s27, 1
      %p130 = por %p128, %p129
      %p132 = scmp.ne.s32.totalorder %s117, %s131
      %p133 = scmp.eq.s32.totalorder %s27, 0
      %p134 = por %p132, %p133
      %s136 = sadd.s32 %s135, 1
      %p139 = scmp.eq.s32.totalorder %s21, 1
      %p140 = scmp.ne.s32.totalorder %s135, %s137
      %p141 = scmp.eq.s32.totalorder %s21, 0
      %p142 = por %p140, %p141
      %p143 = scmp.ne.s32.totalorder %s135, %s137
      %p144 = scmp.eq.s32.totalorder %s26, 1
      %p145 = por %p143, %p144
      %p146 = scmp.ne.s32.totalorder %s137, %s138
      %p147 = scmp.eq.s32.totalorder %s26, 0
      %p148 = por %p146, %p147
      %p149 = scmp.ne.s32.totalorder %s137, %s138
      %p150 = scmp.eq.s32.totalorder %s27, 1
      %p151 = por %p149, %p150
      %p153 = scmp.ne.s32.totalorder %s138, %s152
      %p154 = scmp.eq.s32.totalorder %s27, 0
      %p155 = por %p153, %p154
      %s157 = sadd.s32 %s156, 1
      %p160 = scmp.eq.s32.totalorder %s21, 1
      %p161 = scmp.ne.s32.totalorder %s156, %s158
      %p162 = scmp.eq.s32.totalorder %s21, 0
      %p163 = por %p161, %p162
      %p164 = scmp.ne.s32.totalorder %s156, %s158
      %p165 = scmp.eq.s32.totalorder %s26, 1
      %p166 = por %p164, %p165
      %p167 = scmp.ne.s32.totalorder %s158, %s159
      %p168 = scmp.eq.s32.totalorder %s26, 0
      %p169 = por %p167, %p168
      %p170 = scmp.ne.s32.totalorder %s158, %s159
      %p171 = scmp.eq.s32.totalorder %s27, 1
      %p172 = por %p170, %p171
      %p174 = scmp.ne.s32.totalorder %s159, %s173
      %p175 = scmp.eq.s32.totalorder %s27, 0
      %p176 = por %p174, %p175
      %s178 = sadd.s32 %s177, 1
      %p181 = scmp.eq.s32.totalorder %s21, 1
      %p182 = scmp.ne.s32.totalorder %s177, %s179
      %p183 = scmp.eq.s32.totalorder %s21, 0
      %p184 = por %p182, %p183
      %p185 = scmp.ne.s32.totalorder %s177, %s179
      %p186 = scmp.eq.s32.totalorder %s26, 1
      %p187 = por %p185, %p186
      %p188 = scmp.ne.s32.totalorder %s179, %s180
      %p189 = scmp.eq.s32.totalorder %s26, 0
      %p190 = por %p188, %p189
      %p191 = scmp.ne.s32.totalorder %s179, %s180
      %p192 = scmp.eq.s32.totalorder %s27, 1
      %p193 = por %p191, %p192
      %p195 = scmp.ne.s32.totalorder %s180, %s194
      %p196 = scmp.eq.s32.totalorder %s27, 0
      %p197 = por %p195, %p196
      %s199 = sadd.s32 %s198, 1
      %p202 = scmp.eq.s32.totalorder %s21, 1
      %p203 = scmp.ne.s32.totalorder %s198, %s200
      %p204 = scmp.eq.s32.totalorder %s21, 0
      %p205 = por %p203, %p204
      %p206 = scmp.ne.s32.totalorder %s198, %s200
      %p207 = scmp.eq.s32.totalorder %s26, 1
      %p208 = por %p206, %p207
      %p209 = scmp.ne.s32.totalorder %s200, %s201
      %p210 = scmp.eq.s32.totalorder %s26, 0
      %p211 = por %p209, %p210
      %p212 = scmp.ne.s32.totalorder %s200, %s201
      %p213 = scmp.eq.s32.totalorder %s27, 1
      %p214 = por %p212, %p213
      %p216 = scmp.ne.s32.totalorder %s201, %s215
      %p217 = scmp.eq.s32.totalorder %s27, 0
      %p218 = por %p216, %p217
      %s219 = ssub.s32 %s28, %s40
      %s220 = ssub.s32 %s29, %s36
      %s221 = sor.u32 %s219, %s220
      %p222 = scmp.eq.s32.totalorder %s221, 0
      %s224 = sadd.s32 %s223, 1
      %s225 = scalar_select %p222, %s223, %s224
      %p228 = pneg %p222
      %p229 = scmp.eq.s32.totalorder %s21, 1
      %p230 = por %p228, %p229
      %p231 = scmp.ne.s32.totalorder %s223, %s226
      %p232 = scmp.eq.s32.totalorder %s21, 0
      %p233 = por %p231, %p232
      %p234 = scmp.ne.s32.totalorder %s223, %s226
      %p235 = scmp.eq.s32.totalorder %s26, 1
      %p236 = por %p234, %p235
      %p237 = scmp.ne.s32.totalorder %s226, %s227
      %p238 = scmp.eq.s32.totalorder %s26, 0
      %p239 = por %p237, %p238
      %p240 = scmp.ne.s32.totalorder %s226, %s227
      %p241 = scmp.eq.s32.totalorder %s27, 1
      %p242 = por %p240, %p241
      %p244 = scmp.ne.s32.totalorder %s227, %s243
      %p245 = scmp.eq.s32.totalorder %s27, 0
      %p246 = por %p244, %p245
      %p247 = scmp.le.s32.totalorder 1, %s21
      %p248 = scmp.lt.s32.totalorder %s21, 3
      %p249 = pnand %p247, %p248
      %p250 = pneg %p249
      // Predicated region
      $region9: #{tpu_custom_call.1} parent=5 // pred_check
        _
      $region10: #{tpu_custom_call.1} parent=5 // pred_check_branch
        %252 = sbr.rel (%p249) target = $region12
      $region11: #{tpu_custom_call.1} parent=5 // pred_region
        %s253 = ssub.s32 %s21, 1
        // Predicated region
        $region13: #{tpu_custom_call.1} parent=11 // pred_check
          %p254 = pneg %p106
        $region14: #{tpu_custom_call.1} parent=11 // pred_check_branch
          %256 = sbr.rel (%p254) target = $region16
        $region15: #{tpu_custom_call.1} parent=11 // pred_region
          %s258 = ssub.s32 256, 256
          %259 = vsyncadd [#allocation7], %s258
          %s260 = sshll.u32 [#allocation6], 4
          %s261 = int_to_ptr.vmem [resolvable:$true] %s260
          %266 = dma.hbm_to_vmem [thread:$0]  %s2, 256, %s261, [#allocation7], 64, 64, 4
        $region16: #{tpu_custom_call.1} parent=11 // pred_fallthru
          _
        // Predicated region
        $region17: #{tpu_custom_call.1} parent=11 // pred_check
          %p267 = pneg %p127
        $region18: #{tpu_custom_call.1} parent=11 // pred_check_branch
          %269 = sbr.rel (%p267) target = $region20
        $region19: #{tpu_custom_call.1} parent=11 // pred_region
          _
        $region20: #{tpu_custom_call.1} parent=11 // pred_fallthru
          _
        // Predicated region
        $region21: #{tpu_custom_call.1} parent=11 // pred_check
          %p270 = pneg %p148
        $region22: #{tpu_custom_call.1} parent=11 // pred_check_branch
          %272 = sbr.rel (%p270) target = $region24
        $region23: #{tpu_custom_call.1} parent=11 // pred_region
          %s274 = ssub.s32 256, 256
          %275 = vsyncadd [#allocation7], %s274
          %s276 = sshll.u32 [#allocation8], 4
          %s277 = int_to_ptr.vmem [resolvable:$true] %s276
          %282 = dma.hbm_to_vmem [thread:$0]  %s4, 256, %s277, [#allocation7], 64, 64, 4
        $region24: #{tpu_custom_call.1} parent=11 // pred_fallthru
          _
        // Predicated region
        $region25: #{tpu_custom_call.1} parent=11 // pred_check
          %p283 = pneg %p169
        $region26: #{tpu_custom_call.1} parent=11 // pred_check_branch
          %285 = sbr.rel (%p283) target = $region28
        $region27: #{tpu_custom_call.1} parent=11 // pred_region
          _
        $region28: #{tpu_custom_call.1} parent=11 // pred_fallthru
          _
        // Predicated region
        $region29: #{tpu_custom_call.1} parent=11 // pred_check
          %p286 = pneg %p190
        $region30: #{tpu_custom_call.1} parent=11 // pred_check_branch
          %288 = sbr.rel (%p286) target = $region32
        $region31: #{tpu_custom_call.1} parent=11 // pred_region
          _
        $region32: #{tpu_custom_call.1} parent=11 // pred_fallthru
          _
        // Predicated region
        $region33: #{tpu_custom_call.1} parent=11 // pred_check
          %p289 = pneg %p211
        $region34: #{tpu_custom_call.1} parent=11 // pred_check_branch
          %291 = sbr.rel (%p289) target = $region36
        $region35: #{tpu_custom_call.1} parent=11 // pred_region
          _
        $region36: #{tpu_custom_call.1} parent=11 // pred_fallthru
          _
      $region12: #{tpu_custom_call.1} parent=5 // pred_fallthru
        _
      %p292 = scmp.lt.s32.totalorder %s21, 2
      // Predicated region
      $region37: #{tpu_custom_call.1} parent=5 // pred_check
        %p293 = pneg %p292
      $region38: #{tpu_custom_call.1} parent=5 // pred_check_branch
        %295 = sbr.rel (%p293) target = $region40
      $region39: #{tpu_custom_call.1} parent=5 // pred_region
        // Predicated region
        $region41: #{tpu_custom_call.1} parent=39 // pred_check
          %p296 = pneg %p53
        $region42: #{tpu_custom_call.1} parent=39 // pred_check_branch
          %298 = sbr.rel (%p296) target = $region44
        $region43: #{tpu_custom_call.1} parent=39 // pred_region
          %s299 = sand.u32 %s43, 1
          %s300 = scalar_lea.sflag [#allocation4], %s299
          %s301 = sand.u32 %s43, 1
          %s302 = smul.addr %s301, 8
          %s303 = scalar_lea.vmem [#allocation3], %s302
          %s305 = ssub.s32 128, 128
          %306 = vsyncadd %s300, %s305
          %s307 = smul.addr %s28, 128
          %s308 = scalar_lea.hbm %s0, %s307
          %s310 = sshll.u32 %s303, 4
          %s311 = int_to_ptr.vmem [resolvable:$true] %s310
          %313 = dma.hbm_to_vmem [thread:$0]  %s308, 128, %s311, %s300
        $region44: #{tpu_custom_call.1} parent=39 // pred_fallthru
          _
        // Predicated region
        $region45: #{tpu_custom_call.1} parent=39 // pred_check
          %p314 = pneg %p79
        $region46: #{tpu_custom_call.1} parent=39 // pred_check_branch
          %316 = sbr.rel (%p314) target = $region48
        $region47: #{tpu_custom_call.1} parent=39 // pred_region
          %p317 = scmp.lt.s32.totalorder %s28, 1
          %s318 = scalar_select %p317, %s28, 1
          %s319 = scalar_lea.vmem %s1, %s318
        $region48: #{tpu_custom_call.1} parent=39 // pred_fallthru
          _
      $region40: #{tpu_custom_call.1} parent=5 // pred_fallthru
        _
      %p320 = scmp.le.s32.totalorder 1, %s21
      %p321 = scmp.lt.s32.totalorder %s21, 3
      %p322 = pnand %p320, %p321
      %p323 = pneg %p322
      // Predicated region
      $region49: #{tpu_custom_call.1} parent=5 // pred_check
        _
      $region50: #{tpu_custom_call.1} parent=5 // pred_check_branch
        %325 = sbr.rel (%p322) target = $region52
      $region51: #{tpu_custom_call.1} parent=5 // pred_region
        %s326 = ssub.s32 %s21, 1
        %s327 = sand.u32 %s46, 1
        %s328 = scalar_lea.sflag [#allocation4], %s327
        %s329 = sand.u32 %s46, 1
        %s330 = smul.addr %s329, 8
        %s331 = scalar_lea.vmem [#allocation3], %s330
        // Predicated region
        $region53: #{tpu_custom_call.1} parent=51 // pred_check
          %p332 = pneg %p59
        $region54: #{tpu_custom_call.1} parent=51 // pred_check_branch
          %334 = sbr.rel (%p332) target = $region56
        $region55: #{tpu_custom_call.1} parent=51 // pred_region
          %335 = dma.done %s328, 128
        $region56: #{tpu_custom_call.1} parent=51 // pred_fallthru
          _
        // Predicated region
        $region57: #{tpu_custom_call.1} parent=51 // pred_check
          %p336 = pneg %p106
        $region58: #{tpu_custom_call.1} parent=51 // pred_check_branch
          %338 = sbr.rel (%p336) target = $region60
        $region59: #{tpu_custom_call.1} parent=51 // pred_region
          %339 = dma.done [#allocation7], 256
        $region60: #{tpu_custom_call.1} parent=51 // pred_fallthru
          _
        // Predicated region
        $region61: #{tpu_custom_call.1} parent=51 // pred_check
          %p340 = pneg %p148
        $region62: #{tpu_custom_call.1} parent=51 // pred_check_branch
          %342 = sbr.rel (%p340) target = $region64
        $region63: #{tpu_custom_call.1} parent=51 // pred_region
          %343 = dma.done [#allocation7], 256
        $region64: #{tpu_custom_call.1} parent=51 // pred_fallthru
          _
        %s344 = sand.u32 %s46, 1
        %s345 = scalar_lea.sflag [#allocation4], %s344
        %s346 = sand.u32 %s46, 1
        %s347 = smul.addr %s346, 8
        %s348 = scalar_lea.vmem [#allocation3], %s347
        %p349 = pneg %p59
        %p350 = pneg %p56
        %p351 = scmp.lt.s32.totalorder %s30, 1
        %s352 = scalar_select %p351, %s30, 1
        %s353 = scalar_lea.vmem %s1, %s352
        %p354 = pneg %p85
        %p355 = pneg %p82
        %p356 = pneg %p106
        %p357 = pneg %p103
        %p358 = pneg %p127
        %p359 = pneg %p124
        %p360 = pneg %p148
        %p361 = pneg %p145
        %p362 = pneg %p169
        %p363 = pneg %p166
        %p364 = pneg %p190
        %p365 = pneg %p187
        %p366 = pneg %p211
        %p367 = pneg %p208
        %p368 = pneg %p239
        %p369 = pneg %p236
        %s370 = sand.u32 %s226, 1
        %s371 = scalar_lea.sflag [#allocation5], %s370
        %s372 = sand.u32 %s226, 1
        %s373 = smul.addr %s372, 8
        %s374 = scalar_lea.vmem [#allocation9], %s373
        %p375 = scmp.lt.s32.totalorder %s30, 1
        %s376 = scalar_select %p375, %s30, 1
        %s377 = scalar_lea.vmem %s1, %s376
        %p379 = scmp.eq.s32.totalorder %s31, 0
        // Predicated region
        $region65: #{tpu_custom_call.1} parent=51 // pred_check
          %p380 = pneg %p379
        $region66: #{tpu_custom_call.1} parent=51 // pred_check_branch
          %382 = sbr.rel (%p380) target = $region68
        $region67: #{tpu_custom_call.1} parent=51 // pred_region
          %v383 = vld [vmem:[%s331] sm:$0xff]
          %v384 = vpack.c.bf16 %v383, %v383
          %v385 = vld [vmem:[#allocation6] sm:$0xf]
          %v386 = vld [vmem:[#allocation6 + $0x4] sm:$0xf]
          %v387 = vld [vmem:[#allocation6 + $0x8] sm:$0xf]
          %v388 = vld [vmem:[#allocation6 + $0xc] sm:$0xf]
          %v389 = vld [vmem:[%s3] sm:$0x1]
          %v391 = vlaneseq
          %v392 = vshrl.u32 %v391, 7
          %v393 = vsub.s32 0, %v392
          %v394 = vrot.slane %v389, %v393
          %v400 = vunpack.c.l.b16 %v385
          %v401 = vunpack.c.l.b16 %v386
          %v402 = vunpack.c.l.b16 %v387
          %v403 = vunpack.c.l.b16 %v388
          %v404 = vpack.c.b16 %v401, %v400
          %v405 = vpack.c.b16 %v403, %v402
          %vm408 = vcmask 261120
          %v410 = vsel %vm408, %v384, 0
          %412 = vmatprep.subr.bf16.mxu0 0
          %413 = vmatpush1.bf16.msra.mxu0 %v404
          %414 = vmatprep.subr.bf16.mxu0 0
          %415 = vmatpush1.bf16.msra.mxu0 %v405
          %416 = vmatprep.subr.bf16.mxu0 0
          %417 = vmatpush1.bf16.msra.mxu0 0
          %418 = vmatprep.subr.bf16.mxu0 0
          %419 = vmatpush1.bf16.msra.mxu0 0
          %420 = vmatprep.subr.bf16.mxu0 0
          %421 = vmatpush1.bf16.msra.mxu0 0
          %422 = vmatprep.subr.bf16.mxu0 0
          %423 = vmatpush1.bf16.msra.mxu0 0
          %424 = vmatprep.subr.bf16.mxu0 0
          %425 = vmatpush1.bf16.msra.mxu0 0
          %426 = vmatprep.subr.bf16.mxu0 0
          %427 = vmatpush1.bf16.msra.mxu0 0
          %428 = vmatprep.subr.bf16.mxu0 0
          %429 = vmatpush1.bf16.msra.mxu0 0
          %430 = vmatprep.subr.bf16.mxu0 0
          %431 = vmatpush1.bf16.msra.mxu0 0
          %432 = vmatprep.subr.bf16.mxu0 0
          %433 = vmatpush1.bf16.msra.mxu0 0
          %434 = vmatprep.subr.bf16.mxu0 0
          %435 = vmatpush1.bf16.msra.mxu0 0
          %436 = vmatprep.subr.bf16.mxu0 0
          %437 = vmatpush1.bf16.msra.mxu0 0
          %438 = vmatprep.subr.bf16.mxu0 0
          %439 = vmatpush1.bf16.msra.mxu0 0
          %440 = vmatprep.subr.bf16.mxu0 0
          %441 = vmatpush1.bf16.msra.mxu0 0
          %442 = vmatprep.subr.bf16.mxu0 0
          %443 = vmatpush1.bf16.msra.mxu0 0
          %444 = vmatprep.mubr.bf16.mxu0 0
          %445 = vmatmul.mubr.bf16.gmra.mrb[0].mxu0 %v410
          %v446 = vpop.f32.mrb[0].mxu0
          %v447 = vadd.f32 %v394, %v446
          %v448 = vpop.f32.mrb[0].mxu0
          %v449 = vpop.f32.mrb[0].mxu0
          %v450 = vpop.f32.mrb[0].mxu0
          %451 = vdwg.mxu0
          %v452 = vpack.c.bf16 %v447, %v447
          %vm453 = vcmask 781312
          %454 = vst.msk [vmem:[#allocation2] sm:$0xf] %vm453, %v452
        $region68: #{tpu_custom_call.1} parent=51 // pred_fallthru
          _
        %s455 = smul.u32 %s31, 8
        %s456 = sshra.s32 %s455, 3
        %s457 = sand.u32 %s455, 7
        %s458 = smul.addr %s456, 4
        %s459 = scalar_lea.vmem [#allocation2], %s458
        %v460 = vld [vmem:[%s459] sm:$0xf]
        %v461 = vld [vmem:[#allocation2] sm:$0xf]
        %v462 = vld [vmem:[%s377] sm:$0x1]
        %v464 = vlaneseq
        %v465 = vshrl.u32 %v464, 7
        %v466 = vsub.s32 0, %v465
        %v467 = vrot.slane %v462, %v466
        %v470 = vunpack.c.l.b16 %v461
        %v471 = vpack.c.b16 %v470, %v470
        %472 = vrot.lane.b32.xlu0 %v471, 96
        %v473 = vpop.permute.xlu0 %472
        %vm474 = vcmask 64512
        %v476 = vsel %vm474, %v460, 0
        %v479 = vsel %vm474, %v473, 0
        %481 = vmatprep.subr.bf16.mxu0 0
        %482 = vmatpush1.bf16.xpose.msra.mxu0 %v479
        %483 = vmatprep.subr.bf16.mxu0 0
        %484 = vmatpush1.bf16.xpose.msra.mxu0 0
        %485 = vmatprep.subr.bf16.mxu0 0
        %486 = vmatpush1.bf16.xpose.msra.mxu0 0
        %487 = vmatprep.subr.bf16.mxu0 0
        %488 = vmatpush1.bf16.xpose.msra.mxu0 0
        %489 = vmatprep.subr.bf16.mxu0 0
        %490 = vmatpush1.bf16.xpose.msra.mxu0 0
        %491 = vmatprep.subr.bf16.mxu0 0
        %492 = vmatpush1.bf16.xpose.msra.mxu0 0
        %493 = vmatprep.subr.bf16.mxu0 0
        %494 = vmatpush1.bf16.xpose.msra.mxu0 0
        %495 = vmatprep.subr.bf16.mxu0 0
        %496 = vmatpush1.bf16.xpose.msra.mxu0 0
        %497 = vmatprep.subr.bf16.mxu0 0
        %498 = vmatpush1.bf16.xpose.msra.mxu0 0
        %499 = vmatprep.subr.bf16.mxu0 0
        %500 = vmatpush1.bf16.xpose.msra.mxu0 0
        %501 = vmatprep.subr.bf16.mxu0 0
        %502 = vmatpush1.bf16.xpose.msra.mxu0 0
        %503 = vmatprep.subr.bf16.mxu0 0
        %504 = vmatpush1.bf16.xpose.msra.mxu0 0
        %505 = vmatprep.subr.bf16.mxu0 0
        %506 = vmatpush1.bf16.xpose.msra.mxu0 0
        %507 = vmatprep.subr.bf16.mxu0 0
        %508 = vmatpush1.bf16.xpose.msra.mxu0 0
        %509 = vmatprep.subr.bf16.mxu0 0
        %510 = vmatpush1.bf16.xpose.msra.mxu0 0
        %511 = vmatprep.subr.bf16.mxu0 0
        %512 = vmatpush1.bf16.xpose.msra.mxu0 0
        %513 = vmatprep.mubr.bf16.mxu0 0
        %514 = vmatmul.mubr.bf16.gmra.mrb[0].mxu0 %v476
        %v515 = vpop.f32.mrb[0].mxu0
        %v516 = vadd.f32 %v467, %v515
        %v517 = vpop.f32.mrb[0].mxu0
        %v518 = vpop.f32.mrb[0].mxu0
        %v519 = vpop.f32.mrb[0].mxu0
        %520 = vdwg.mxu0
        %v521 = vsel %vm474, %v516, -inf
        %522 = vmax.xlane.f32.xlu0 %v521
        %v523 = vpop.xlane.xlu0 %522
        %v524 = vsub.f32 %v516, %v523
        %v525 = vmul.f32 %v524, 1.442695
        %v526 = vpow.pop %v525
        %v527 = vsel %vm474, %v526, 0.0
        %528 = vadd.xlane.f32.xlu0 %v527
        %v529 = vpop.xlane.xlu0 %528
        %v530 = vpack.c.bf16 %v526, %v526
        %531 = vrot.lane.b32.xlu0 %v471, 64
        %v532 = vpop.permute.xlu0 %531
        %v534 = vsel %vm474, %v530, 0
        %vm536 = vcmask 1043456
        %v538 = vsel %vm536, %v532, 0
        %540 = vmatprep.subr.bf16.mxu0 0
        %541 = vmatpush1.bf16.msra.mxu0 %v538
        %542 = vmatprep.subr.bf16.mxu0 0
        %543 = vmatpush1.bf16.msra.mxu0 0
        %544 = vmatprep.subr.bf16.mxu0 0
        %545 = vmatpush1.bf16.msra.mxu0 0
        %546 = vmatprep.subr.bf16.mxu0 0
        %547 = vmatpush1.bf16.msra.mxu0 0
        %548 = vmatprep.subr.bf16.mxu0 0
        %549 = vmatpush1.bf16.msra.mxu0 0
        %550 = vmatprep.subr.bf16.mxu0 0
        %551 = vmatpush1.bf16.msra.mxu0 0
        %552 = vmatprep.subr.bf16.mxu0 0
        %553 = vmatpush1.bf16.msra.mxu0 0
        %554 = vmatprep.subr.bf16.mxu0 0
        %555 = vmatpush1.bf16.msra.mxu0 0
        %556 = vmatprep.subr.bf16.mxu0 0
        %557 = vmatpush1.bf16.msra.mxu0 0
        %558 = vmatprep.subr.bf16.mxu0 0
        %559 = vmatpush1.bf16.msra.mxu0 0
        %560 = vmatprep.subr.bf16.mxu0 0
        %561 = vmatpush1.bf16.msra.mxu0 0
        %562 = vmatprep.subr.bf16.mxu0 0
        %563 = vmatpush1.bf16.msra.mxu0 0
        %564 = vmatprep.subr.bf16.mxu0 0
        %565 = vmatpush1.bf16.msra.mxu0 0
        %566 = vmatprep.subr.bf16.mxu0 0
        %567 = vmatpush1.bf16.msra.mxu0 0
        %568 = vmatprep.subr.bf16.mxu0 0
        %569 = vmatpush1.bf16.msra.mxu0 0
        %570 = vmatprep.subr.bf16.mxu0 0
        %571 = vmatpush1.bf16.msra.mxu0 0
        %572 = vmatprep.mubr.bf16.mxu0 0
        %573 = vmatmul.mubr.bf16.gmra.mrb[0].mxu0 %v534
        %v574 = vpop.f32.mrb[0].mxu0
        %v575 = vadd.f32 0.0, %v574
        %v576 = vpop.f32.mrb[0].mxu0
        %v577 = vpop.f32.mrb[0].mxu0
        %v578 = vpop.f32.mrb[0].mxu0
        %579 = vdwg.mxu0
        %v580 = vrcp.pop %v529
        %v581 = vmul.f32 %v575, %v580
        %v583 = vunpack.c.l.b16 %v460
        %v584 = vpack.c.b16 %v583, %v583
        %585 = vrot.lane.b32.xlu0 %v584, 120
        %v586 = vpop.permute.xlu0 %585
        %587 = vrot.lane.b32.xlu0 %v471, 88
        %v588 = vpop.permute.xlu0 %587
        %v590 = vsel %vm474, %v586, 0
        %v593 = vsel %vm474, %v588, 0
        %595 = vmatprep.subr.bf16.mxu0 0
        %596 = vmatpush1.bf16.xpose.msra.mxu0 %v593
        %597 = vmatprep.subr.bf16.mxu0 0
        %598 = vmatpush1.bf16.xpose.msra.mxu0 0
        %599 = vmatprep.subr.bf16.mxu0 0
        %600 = vmatpush1.bf16.xpose.msra.mxu0 0
        %601 = vmatprep.subr.bf16.mxu0 0
        %602 = vmatpush1.bf16.xpose.msra.mxu0 0
        %603 = vmatprep.subr.bf16.mxu0 0
        %604 = vmatpush1.bf16.xpose.msra.mxu0 0
        %605 = vmatprep.subr.bf16.mxu0 0
        %606 = vmatpush1.bf16.xpose.msra.mxu0 0
        %607 = vmatprep.subr.bf16.mxu0 0
        %608 = vmatpush1.bf16.xpose.msra.mxu0 0
        %609 = vmatprep.subr.bf16.mxu0 0
        %610 = vmatpush1.bf16.xpose.msra.mxu0 0
        %611 = vmatprep.subr.bf16.mxu0 0
        %612 = vmatpush1.bf16.xpose.msra.mxu0 0
        %613 = vmatprep.subr.bf16.mxu0 0
        %614 = vmatpush1.bf16.xpose.msra.mxu0 0
        %615 = vmatprep.subr.bf16.mxu0 0
        %616 = vmatpush1.bf16.xpose.msra.mxu0 0
        %617 = vmatprep.subr.bf16.mxu0 0
        %618 = vmatpush1.bf16.xpose.msra.mxu0 0
        %619 = vmatprep.subr.bf16.mxu0 0
        %620 = vmatpush1.bf16.xpose.msra.mxu0 0
        %621 = vmatprep.subr.bf16.mxu0 0
        %622 = vmatpush1.bf16.xpose.msra.mxu0 0
        %623 = vmatprep.subr.bf16.mxu0 0
        %624 = vmatpush1.bf16.xpose.msra.mxu0 0
        %625 = vmatprep.subr.bf16.mxu0 0
        %626 = vmatpush1.bf16.xpose.msra.mxu0 0
        %627 = vmatprep.mubr.bf16.mxu0 0
        %628 = vmatmul.mubr.bf16.gmra.mrb[0].mxu0 %v590
        %v629 = vpop.f32.mrb[0].mxu0
        %v630 = vadd.f32 %v467, %v629
        %v631 = vpop.f32.mrb[0].mxu0
        %v632 = vpop.f32.mrb[0].mxu0
        %v633 = vpop.f32.mrb[0].mxu0
        %634 = vdwg.mxu0
        %v635 = vsel %vm474, %v630, -inf
        %636 = vmax.xlane.f32.xlu0 %v635
        %v637 = vpop.xlane.xlu0 %636
        %v638 = vsub.f32 %v630, %v637
        %v639 = vmul.f32 %v638, 1.442695
        %v640 = vpow.pop %v639
        %v641 = vsel %vm474, %v640, 0.0
        %642 = vadd.xlane.f32.xlu0 %v641
        %v643 = vpop.xlane.xlu0 %642
        %v644 = vpack.c.bf16 %v640, %v640
        %645 = vrot.lane.b32.xlu0 %v471, 56
        %v646 = vpop.permute.xlu0 %645
        %v648 = vsel %vm474, %v644, 0
        %v651 = vsel %vm536, %v646, 0
        %653 = vmatprep.subr.bf16.mxu0 0
        %654 = vmatpush1.bf16.msra.mxu0 %v651
        %655 = vmatprep.subr.bf16.mxu0 0
        %656 = vmatpush1.bf16.msra.mxu0 0
        %657 = vmatprep.subr.bf16.mxu0 0
        %658 = vmatpush1.bf16.msra.mxu0 0
        %659 = vmatprep.subr.bf16.mxu0 0
        %660 = vmatpush1.bf16.msra.mxu0 0
        %661 = vmatprep.subr.bf16.mxu0 0
        %662 = vmatpush1.bf16.msra.mxu0 0
        %663 = vmatprep.subr.bf16.mxu0 0
        %664 = vmatpush1.bf16.msra.mxu0 0
        %665 = vmatprep.subr.bf16.mxu0 0
        %666 = vmatpush1.bf16.msra.mxu0 0
        %667 = vmatprep.subr.bf16.mxu0 0
        %668 = vmatpush1.bf16.msra.mxu0 0
        %669 = vmatprep.subr.bf16.mxu0 0
        %670 = vmatpush1.bf16.msra.mxu0 0
        %671 = vmatprep.subr.bf16.mxu0 0
        %672 = vmatpush1.bf16.msra.mxu0 0
        %673 = vmatprep.subr.bf16.mxu0 0
        %674 = vmatpush1.bf16.msra.mxu0 0
        %675 = vmatprep.subr.bf16.mxu0 0
        %676 = vmatpush1.bf16.msra.mxu0 0
        %677 = vmatprep.subr.bf16.mxu0 0
        %678 = vmatpush1.bf16.msra.mxu0 0
        %679 = vmatprep.subr.bf16.mxu0 0
        %680 = vmatpush1.bf16.msra.mxu0 0
        %681 = vmatprep.subr.bf16.mxu0 0
        %682 = vmatpush1.bf16.msra.mxu0 0
        %683 = vmatprep.subr.bf16.mxu0 0
        %684 = vmatpush1.bf16.msra.mxu0 0
        %685 = vmatprep.mubr.bf16.mxu0 0
        %686 = vmatmul.mubr.bf16.gmra.mrb[0].mxu0 %v648
        %v687 = vpop.f32.mrb[0].mxu0
        %v688 = vadd.f32 0.0, %v687
        %v689 = vpop.f32.mrb[0].mxu0
        %v690 = vpop.f32.mrb[0].mxu0
        %v691 = vpop.f32.mrb[0].mxu0
        %692 = vdwg.mxu0
        %v693 = vrcp.pop %v643
        %v694 = vmul.f32 %v688, %v693
        %695 = vrot.lane.b32.xlu0 %v584, 112
        %v696 = vpop.permute.xlu0 %695
        %697 = vrot.lane.b32.xlu0 %v471, 80
        %v698 = vpop.permute.xlu0 %697
        %v700 = vsel %vm474, %v696, 0
        %v703 = vsel %vm474, %v698, 0
        %705 = vmatprep.subr.bf16.mxu0 0
        %706 = vmatpush1.bf16.xpose.msra.mxu0 %v703
        %707 = vmatprep.subr.bf16.mxu0 0
        %708 = vmatpush1.bf16.xpose.msra.mxu0 0
        %709 = vmatprep.subr.bf16.mxu0 0
        %710 = vmatpush1.bf16.xpose.msra.mxu0 0
        %711 = vmatprep.subr.bf16.mxu0 0
        %712 = vmatpush1.bf16.xpose.msra.mxu0 0
        %713 = vmatprep.subr.bf16.mxu0 0
        %714 = vmatpush1.bf16.xpose.msra.mxu0 0
        %715 = vmatprep.subr.bf16.mxu0 0
        %716 = vmatpush1.bf16.xpose.msra.mxu0 0
        %717 = vmatprep.subr.bf16.mxu0 0
        %718 = vmatpush1.bf16.xpose.msra.mxu0 0
        %719 = vmatprep.subr.bf16.mxu0 0
        %720 = vmatpush1.bf16.xpose.msra.mxu0 0
        %721 = vmatprep.subr.bf16.mxu0 0
        %722 = vmatpush1.bf16.xpose.msra.mxu0 0
        %723 = vmatprep.subr.bf16.mxu0 0
        %724 = vmatpush1.bf16.xpose.msra.mxu0 0
        %725 = vmatprep.subr.bf16.mxu0 0
        %726 = vmatpush1.bf16.xpose.msra.mxu0 0
        %727 = vmatprep.subr.bf16.mxu0 0
        %728 = vmatpush1.bf16.xpose.msra.mxu0 0
        %729 = vmatprep.subr.bf16.mxu0 0
        %730 = vmatpush1.bf16.xpose.msra.mxu0 0
        %731 = vmatprep.subr.bf16.mxu0 0
        %732 = vmatpush1.bf16.xpose.msra.mxu0 0
        %733 = vmatprep.subr.bf16.mxu0 0
        %734 = vmatpush1.bf16.xpose.msra.mxu0 0
        %735 = vmatprep.subr.bf16.mxu0 0
        %736 = vmatpush1.bf16.xpose.msra.mxu0 0
        %737 = vmatprep.mubr.bf16.mxu0 0
        %738 = vmatmul.mubr.bf16.gmra.mrb[0].mxu0 %v700
        %v739 = vpop.f32.mrb[0].mxu0
        %v740 = vadd.f32 %v467, %v739
        %v741 = vpop.f32.mrb[0].mxu0
        %v742 = vpop.f32.mrb[0].mxu0
        %v743 = vpop.f32.mrb[0].mxu0
        %744 = vdwg.mxu0
        %v745 = vsel %vm474, %v740, -inf
        %746 = vmax.xlane.f32.xlu0 %v745
        %v747 = vpop.xlane.xlu0 %746
        %v748 = vsub.f32 %v740, %v747
        %v749 = vmul.f32 %v748, 1.442695
        %v750 = vpow.pop %v749
        %v751 = vsel %vm474, %v750, 0.0
        %752 = vadd.xlane.f32.xlu0 %v751
        %v753 = vpop.xlane.xlu0 %752
        %v754 = vpack.c.bf16 %v750, %v750
        %755 = vrot.lane.b32.xlu0 %v471, 48
        %v756 = vpop.permute.xlu0 %755
        %v758 = vsel %vm474, %v754, 0
        %v761 = vsel %vm536, %v756, 0
        %763 = vmatprep.subr.bf16.mxu0 0
        %764 = vmatpush1.bf16.msra.mxu0 %v761
        %765 = vmatprep.subr.bf16.mxu0 0
        %766 = vmatpush1.bf16.msra.mxu0 0
        %767 = vmatprep.subr.bf16.mxu0 0
        %768 = vmatpush1.bf16.msra.mxu0 0
        %769 = vmatprep.subr.bf16.mxu0 0
        %770 = vmatpush1.bf16.msra.mxu0 0
        %771 = vmatprep.subr.bf16.mxu0 0
        %772 = vmatpush1.bf16.msra.mxu0 0
        %773 = vmatprep.subr.bf16.mxu0 0
        %774 = vmatpush1.bf16.msra.mxu0 0
        %775 = vmatprep.subr.bf16.mxu0 0
        %776 = vmatpush1.bf16.msra.mxu0 0
        %777 = vmatprep.subr.bf16.mxu0 0
        %778 = vmatpush1.bf16.msra.mxu0 0
        %779 = vmatprep.subr.bf16.mxu0 0
        %780 = vmatpush1.bf16.msra.mxu0 0
        %781 = vmatprep.subr.bf16.mxu0 0
        %782 = vmatpush1.bf16.msra.mxu0 0
        %783 = vmatprep.subr.bf16.mxu0 0
        %784 = vmatpush1.bf16.msra.mxu0 0
        %785 = vmatprep.subr.bf16.mxu0 0
        %786 = vmatpush1.bf16.msra.mxu0 0
        %787 = vmatprep.subr.bf16.mxu0 0
        %788 = vmatpush1.bf16.msra.mxu0 0
        %789 = vmatprep.subr.bf16.mxu0 0
        %790 = vmatpush1.bf16.msra.mxu0 0
        %791 = vmatprep.subr.bf16.mxu0 0
        %792 = vmatpush1.bf16.msra.mxu0 0
        %793 = vmatprep.subr.bf16.mxu0 0
        %794 = vmatpush1.bf16.msra.mxu0 0
        %795 = vmatprep.mubr.bf16.mxu0 0
        %796 = vmatmul.mubr.bf16.gmra.mrb[0].mxu0 %v758
        %v797 = vpop.f32.mrb[0].mxu0
        %v798 = vadd.f32 0.0, %v797
        %v799 = vpop.f32.mrb[0].mxu0
        %v800 = vpop.f32.mrb[0].mxu0
        %v801 = vpop.f32.mrb[0].mxu0
        %802 = vdwg.mxu0
        %v803 = vrcp.pop %v753
        %v804 = vmul.f32 %v798, %v803
        %805 = vrot.lane.b32.xlu0 %v584, 104
        %v806 = vpop.permute.xlu0 %805
        %807 = vrot.lane.b32.xlu0 %v471, 72
        %v808 = vpop.permute.xlu0 %807
        %v810 = vsel %vm474, %v806, 0
        %v813 = vsel %vm474, %v808, 0
        %815 = vmatprep.subr.bf16.mxu0 0
        %816 = vmatpush1.bf16.xpose.msra.mxu0 %v813
        %817 = vmatprep.subr.bf16.mxu0 0
        %818 = vmatpush1.bf16.xpose.msra.mxu0 0
        %819 = vmatprep.subr.bf16.mxu0 0
        %820 = vmatpush1.bf16.xpose.msra.mxu0 0
        %821 = vmatprep.subr.bf16.mxu0 0
        %822 = vmatpush1.bf16.xpose.msra.mxu0 0
        %823 = vmatprep.subr.bf16.mxu0 0
        %824 = vmatpush1.bf16.xpose.msra.mxu0 0
        %825 = vmatprep.subr.bf16.mxu0 0
        %826 = vmatpush1.bf16.xpose.msra.mxu0 0
        %827 = vmatprep.subr.bf16.mxu0 0
        %828 = vmatpush1.bf16.xpose.msra.mxu0 0
        %829 = vmatprep.subr.bf16.mxu0 0
        %830 = vmatpush1.bf16.xpose.msra.mxu0 0
        %831 = vmatprep.subr.bf16.mxu0 0
        %832 = vmatpush1.bf16.xpose.msra.mxu0 0
        %833 = vmatprep.subr.bf16.mxu0 0
        %834 = vmatpush1.bf16.xpose.msra.mxu0 0
        %835 = vmatprep.subr.bf16.mxu0 0
        %836 = vmatpush1.bf16.xpose.msra.mxu0 0
        %837 = vmatprep.subr.bf16.mxu0 0
        %838 = vmatpush1.bf16.xpose.msra.mxu0 0
        %839 = vmatprep.subr.bf16.mxu0 0
        %840 = vmatpush1.bf16.xpose.msra.mxu0 0
        %841 = vmatprep.subr.bf16.mxu0 0
        %842 = vmatpush1.bf16.xpose.msra.mxu0 0
        %843 = vmatprep.subr.bf16.mxu0 0
        %844 = vmatpush1.bf16.xpose.msra.mxu0 0
        %845 = vmatprep.subr.bf16.mxu0 0
        %846 = vmatpush1.bf16.xpose.msra.mxu0 0
        %847 = vmatprep.mubr.bf16.mxu0 0
        %848 = vmatmul.mubr.bf16.gmra.mrb[0].mxu0 %v810
        %v849 = vpop.f32.mrb[0].mxu0
        %v850 = vadd.f32 %v467, %v849
        %v851 = vpop.f32.mrb[0].mxu0
        %v852 = vpop.f32.mrb[0].mxu0
        %v853 = vpop.f32.mrb[0].mxu0
        %854 = vdwg.mxu0
        %v855 = vsel %vm474, %v850, -inf
        %856 = vmax.xlane.f32.xlu0 %v855
        %v857 = vpop.xlane.xlu0 %856
        %v858 = vsub.f32 %v850, %v857
        %v859 = vmul.f32 %v858, 1.442695
        %v860 = vpow.pop %v859
        %v861 = vsel %vm474, %v860, 0.0
        %862 = vadd.xlane.f32.xlu0 %v861
        %v863 = vpop.xlane.xlu0 %862
        %v864 = vpack.c.bf16 %v860, %v860
        %865 = vrot.lane.b32.xlu0 %v471, 40
        %v866 = vpop.permute.xlu0 %865
        %v868 = vsel %vm474, %v864, 0
        %v871 = vsel %vm536, %v866, 0
        %873 = vmatprep.subr.bf16.mxu0 0
        %874 = vmatpush1.bf16.msra.mxu0 %v871
        %875 = vmatprep.subr.bf16.mxu0 0
        %876 = vmatpush1.bf16.msra.mxu0 0
        %877 = vmatprep.subr.bf16.mxu0 0
        %878 = vmatpush1.bf16.msra.mxu0 0
        %879 = vmatprep.subr.bf16.mxu0 0
        %880 = vmatpush1.bf16.msra.mxu0 0
        %881 = vmatprep.subr.bf16.mxu0 0
        %882 = vmatpush1.bf16.msra.mxu0 0
        %883 = vmatprep.subr.bf16.mxu0 0
        %884 = vmatpush1.bf16.msra.mxu0 0
        %885 = vmatprep.subr.bf16.mxu0 0
        %886 = vmatpush1.bf16.msra.mxu0 0
        %887 = vmatprep.subr.bf16.mxu0 0
        %888 = vmatpush1.bf16.msra.mxu0 0
        %889 = vmatprep.subr.bf16.mxu0 0
        %890 = vmatpush1.bf16.msra.mxu0 0
        %891 = vmatprep.subr.bf16.mxu0 0
        %892 = vmatpush1.bf16.msra.mxu0 0
        %893 = vmatprep.subr.bf16.mxu0 0
        %894 = vmatpush1.bf16.msra.mxu0 0
        %895 = vmatprep.subr.bf16.mxu0 0
        %896 = vmatpush1.bf16.msra.mxu0 0
        %897 = vmatprep.subr.bf16.mxu0 0
        %898 = vmatpush1.bf16.msra.mxu0 0
        %899 = vmatprep.subr.bf16.mxu0 0
        %900 = vmatpush1.bf16.msra.mxu0 0
        %901 = vmatprep.subr.bf16.mxu0 0
        %902 = vmatpush1.bf16.msra.mxu0 0
        %903 = vmatprep.subr.bf16.mxu0 0
        %904 = vmatpush1.bf16.msra.mxu0 0
        %905 = vmatprep.mubr.bf16.mxu0 0
        %906 = vmatmul.mubr.bf16.gmra.mrb[0].mxu0 %v868
        %v907 = vpop.f32.mrb[0].mxu0
        %v908 = vadd.f32 0.0, %v907
        %v909 = vpop.f32.mrb[0].mxu0
        %v910 = vpop.f32.mrb[0].mxu0
        %v911 = vpop.f32.mrb[0].mxu0
        %912 = vdwg.mxu0
        %v913 = vrcp.pop %v863
        %v914 = vmul.f32 %v908, %v913
        %916 = vrot.lane.b32.xlu0 %v694, 8
        %v917 = vpop.permute.xlu0 %916
        %920 = vrot.lane.b32.xlu0 %v804, 16
        %v921 = vpop.permute.xlu0 %920
        %924 = vrot.lane.b32.xlu0 %v914, 24
        %v925 = vpop.permute.xlu0 %924
        %v927 = vsel %vm474, %v581, %v917
        %vm928 = vcmask 130048
        %v929 = vsel %vm928, %v927, %v921
        %vm930 = vcmask 195584
        %v931 = vsel %vm930, %v929, %v925
        %v932 = vpack.c.bf16 %v931, %v931
        %v933 = vld [vmem:[#allocation8] sm:$0xf]
        %v934 = vld [vmem:[#allocation8 + $0x4] sm:$0xf]
        %v935 = vld [vmem:[#allocation8 + $0x8] sm:$0xf]
        %v936 = vld [vmem:[#allocation8 + $0xc] sm:$0xf]
        %s937 = scalar_lea.vmem %s331, %s455 [#allocation3]
        %v938 = vld [vmem:[%s937] sm:$0xff]
        %v939 = vld [vmem:[%s5] sm:$0x1]
        %v941 = vlaneseq
        %v942 = vshrl.u32 %v941, 7
        %v943 = vsub.s32 0, %v942
        %v944 = vrot.slane %v939, %v943
        %v950 = vunpack.c.l.b16 %v933
        %v951 = vunpack.c.l.b16 %v934
        %v952 = vunpack.c.l.b16 %v935
        %v953 = vunpack.c.l.b16 %v936
        %v954 = vpack.c.b16 %v951, %v950
        %v955 = vpack.c.b16 %v953, %v952
        %vm958 = vcmask 261120
        %v960 = vsel %vm958, %v932, 0
        %962 = vmatprep.subr.bf16.mxu0 0
        %963 = vmatpush1.bf16.msra.mxu0 %v954
        %964 = vmatprep.subr.bf16.mxu0 0
        %965 = vmatpush1.bf16.msra.mxu0 %v955
        %966 = vmatprep.subr.bf16.mxu0 0
        %967 = vmatpush1.bf16.msra.mxu0 0
        %968 = vmatprep.subr.bf16.mxu0 0
        %969 = vmatpush1.bf16.msra.mxu0 0
        %970 = vmatprep.subr.bf16.mxu0 0
        %971 = vmatpush1.bf16.msra.mxu0 0
        %972 = vmatprep.subr.bf16.mxu0 0
        %973 = vmatpush1.bf16.msra.mxu0 0
        %974 = vmatprep.subr.bf16.mxu0 0
        %975 = vmatpush1.bf16.msra.mxu0 0
        %976 = vmatprep.subr.bf16.mxu0 0
        %977 = vmatpush1.bf16.msra.mxu0 0
        %978 = vmatprep.subr.bf16.mxu0 0
        %979 = vmatpush1.bf16.msra.mxu0 0
        %980 = vmatprep.subr.bf16.mxu0 0
        %981 = vmatpush1.bf16.msra.mxu0 0
        %982 = vmatprep.subr.bf16.mxu0 0
        %983 = vmatpush1.bf16.msra.mxu0 0
        %984 = vmatprep.subr.bf16.mxu0 0
        %985 = vmatpush1.bf16.msra.mxu0 0
        %986 = vmatprep.subr.bf16.mxu0 0
        %987 = vmatpush1.bf16.msra.mxu0 0
        %988 = vmatprep.subr.bf16.mxu0 0
        %989 = vmatpush1.bf16.msra.mxu0 0
        %990 = vmatprep.subr.bf16.mxu0 0
        %991 = vmatpush1.bf16.msra.mxu0 0
        %992 = vmatprep.subr.bf16.mxu0 0
        %993 = vmatpush1.bf16.msra.mxu0 0
        %994 = vmatprep.mubr.bf16.mxu0 0
        %995 = vmatmul.mubr.bf16.gmra.mrb[0].mxu0 %v960
        %v996 = vpop.f32.mrb[0].mxu0
        %v997 = vadd.f32 %v944, %v996
        %v998 = vpop.f32.mrb[0].mxu0
        %v999 = vpop.f32.mrb[0].mxu0
        %v1000 = vpop.f32.mrb[0].mxu0
        %1001 = vdwg.mxu0
        %v1002 = vadd.f32 %v997, %v938
        %v1003 = vsel %vm958, %v1002, 0.0
        %1004 = vadd.xlane.f32.xlu0 %v1003
        %v1005 = vpop.xlane.xlu0 %1004
        %v1006 = vrcp.pop 32.0
        %v1007 = vmul.f32 %v1005, %v1006
        %v1008 = vsub.f32 %v1002, %v1007
        %v1009 = vmul.f32 %v1008, %v1008
        %v1010 = vsel %vm958, %v1009, 0.0
        %1011 = vadd.xlane.f32.xlu0 %v1010
        %v1012 = vpop.xlane.xlu0 %1011
        %v1013 = vmul.f32 %v1012, %v1006
        %v1014 = vadd.f32 %v1013, 1e-12
        %v1015 = vrsqrt.pop %v1014
        %v1016 = vmul.f32 %v1008, %v1015
        %v1017 = vld [vmem:[%s6] sm:$0x1]
        %v1019 = vlaneseq
        %v1020 = vshrl.u32 %v1019, 7
        %v1021 = vsub.s32 0, %v1020
        %v1022 = vrot.slane %v1017, %v1021
        %v1024 = vmul.f32 %v1016, %v1022
        %v1025 = vld [vmem:[%s7] sm:$0x1]
        %v1027 = vlaneseq
        %v1028 = vshrl.u32 %v1027, 7
        %v1029 = vsub.s32 0, %v1028
        %v1030 = vrot.slane %v1025, %v1029
        %v1032 = vadd.f32 %v1024, %v1030
        %1033 = vst.msk [vmem:[%s374] sm:$0xff] %vm958, %v1032
        %s1034 = sand.u32 %s226, 1
        %s1035 = scalar_lea.sflag [#allocation5], %s1034
        %s1036 = sand.u32 %s226, 1
        %s1037 = smul.addr %s1036, 8
        %s1038 = scalar_lea.vmem [#allocation9], %s1037
        // Predicated region
        $region69: #{tpu_custom_call.1} parent=51 // pred_check
          %p1039 = pneg %p236
        $region70: #{tpu_custom_call.1} parent=51 // pred_check_branch
          %1041 = sbr.rel (%p1039) target = $region72
        $region71: #{tpu_custom_call.1} parent=51 // pred_region
          %s1043 = ssub.s32 128, 128
          %1044 = vsyncadd %s1035, %s1043
          %s1045 = sadd.s32 %s31, %s30
          %s1046 = smul.addr %s1045, 128
          %s1047 = scalar_lea.hbm %s8, %s1046
          %s1049 = sshll.u32 %s1038, 4
          %s1050 = int_to_ptr.vmem [resolvable:$true] %s1049
          %1052 = dma.vmem_to_hbm [thread:$0]  %s1050, 128, %s1047, %s1035
        $region72: #{tpu_custom_call.1} parent=51 // pred_fallthru
          _
      $region52: #{tpu_custom_call.1} parent=5 // pred_fallthru
        _
      %p1053 = scmp.le.s32.totalorder 2, %s21
      // Predicated region
      $region73: #{tpu_custom_call.1} parent=5 // pred_check
        %p1054 = pneg %p1053
      $region74: #{tpu_custom_call.1} parent=5 // pred_check_branch
        %1056 = sbr.rel (%p1054) target = $region76
      $region75: #{tpu_custom_call.1} parent=5 // pred_region
        %s1057 = ssub.s32 %s21, 2
        // Predicated region
        $region77: #{tpu_custom_call.1} parent=75 // pred_check
          %p1058 = pneg %p242
        $region78: #{tpu_custom_call.1} parent=75 // pred_check_branch
          %1060 = sbr.rel (%p1058) target = $region80
        $region79: #{tpu_custom_call.1} parent=75 // pred_region
          %s1061 = sand.u32 %s227, 1
          %s1062 = scalar_lea.sflag [#allocation5], %s1061
          %s1063 = sand.u32 %s227, 1
          %s1064 = smul.addr %s1063, 8
          %s1065 = scalar_lea.vmem [#allocation9], %s1064
          %1066 = dma.done %s1062, 128
        $region80: #{tpu_custom_call.1} parent=75 // pred_fallthru
          _
      $region76: #{tpu_custom_call.1} parent=5 // pred_fallthru
        _
    $region6: #{tpu_custom_call.1} parent=1 // loop_footer
      %s25 = sadd.s32 1, %s21
    $region7: #{tpu_custom_call.1} parent=1 // loop_footer_branch
      %20 = sbr.rel target = $region3
    $region8: #{tpu_custom_call.1} parent=1 // loop_exit
      _
    %1067 = vsyncpa [#allocation4], 1
    %s1068 = scalar_lea.sflag [#allocation4], 1
    %1069 = vsyncpa %s1068, 1
    %1070 = vsyncpa [#allocation7], 1
    %1071 = vsyncpa [#allocation5], 1
    %s1072 = scalar_lea.sflag [#allocation5], 1
    %1073 = vsyncpa %s1072, 1

</llo_original>
